<compile_context>
chip_gen: v5e
topology: v5e:2x2
jax: 0.10.0
libtpu: 0.0.40
codegen_flags: <defaults>
</compile_context>

<pallas_src>
import functools

import jax
import jax.numpy as jnp
from jax import lax
from jax.experimental import pallas as pl
from jax.experimental.pallas import tpu as pltpu


DEFAULT_VMEM_LIMIT = 64 * 1024 * 1024   # explicit scoped-VMEM ceiling (<= physical on all gens)


def _round_up(x, m):
    return (x + m - 1) // m * m


def _pick_tile(dim, pref):
    """Preferred tile if it divides `dim`, else fall back to the full extent."""
    return pref if dim % pref == 0 else dim


_NUM_TC_CACHE = [None]


def _num_tensorcores():
    """Best-effort TensorCores-per-chip (2 on v7x). Falls back to 1 (no split)."""
    if _NUM_TC_CACHE[0] is None:
        n = 1
        try:
            info = pltpu.get_tpu_info()
            for name in ("num_cores", "core_count", "num_tensorcores",
                         "tensorcores_per_chip", "cores_per_chip"):
                v = getattr(info, name, None)
                if isinstance(v, int) and v > 0:
                    n = v
                    break
        except Exception:
            n = 1
        _NUM_TC_CACHE[0] = n
    return _NUM_TC_CACHE[0]


# ----------------------------------------------------------------------------
# Tiled matmul + bias: used for the hoisted LSTM input projection and the
# decoder.  x:(M,K) @ w:(K,N) (pre-transposed) + b:(1,N) -> (M,N).
# f32 accumulation in VMEM scratch; inputs/outputs may be bf16.
# ----------------------------------------------------------------------------
def _matmul_bias_kernel(x_ref, w_ref, b_ref, o_ref, acc_ref):
    @pl.when(pl.program_id(2) == 0)
    def _():
        acc_ref[...] = jnp.zeros_like(acc_ref)

    acc_ref[...] += jnp.dot(x_ref[...], w_ref[...],
                            preferred_element_type=jnp.float32)

    @pl.when(pl.program_id(2) == pl.num_programs(2) - 1)
    def _():
        o_ref[...] = (acc_ref[...] + b_ref[...]).astype(o_ref.dtype)


def matmul_bias(x, w, b, *, tm=256, tn=512, tk=None,
                compute_dtype=jnp.bfloat16, out_dtype=None,
                vmem_limit_bytes=DEFAULT_VMEM_LIMIT):
    M, K = x.shape
    Kw, N = w.shape
    assert K == Kw and b.shape == (1, N)
    if out_dtype is None:
        out_dtype = compute_dtype
    if tk is None:
        tk = 1024 if compute_dtype == jnp.bfloat16 else 512

    # Clamp tiles to the (alignment-padded) problem size, keep (8,128) layout.
    tm = min(tm, _round_up(M, 8))
    tn = min(tn, _round_up(N, 128))
    tk = min(tk, _round_up(K, 128))
    Mp, Np, Kp = _round_up(M, tm), _round_up(N, tn), _round_up(K, tk)

    x = x.astype(compute_dtype)
    w = w.astype(compute_dtype)
    b = b.astype(jnp.float32)
    # Zero-padding K/N/M keeps the matmul exact; output is sliced back below.
    if (Mp, Kp) != (M, K):
        x = jnp.pad(x, ((0, Mp - M), (0, Kp - K)))
    if (Kp, Np) != (K, N):
        w = jnp.pad(w, ((0, Kp - K), (0, Np - N)))
    if Np != N:
        b = jnp.pad(b, ((0, 0), (0, Np - N)))

    out = pl.pallas_call(
        _matmul_bias_kernel,
        out_shape=jax.ShapeDtypeStruct((Mp, Np), out_dtype),
        grid_spec=pltpu.PrefetchScalarGridSpec(
            num_scalar_prefetch=0,
            grid=(Mp // tm, Np // tn, Kp // tk),
            in_specs=[
                pl.BlockSpec((tm, tk), lambda i, j, k: (i, k)),   # x tile
                pl.BlockSpec((tk, tn), lambda i, j, k: (k, j)),   # w tile
                pl.BlockSpec((1, tn), lambda i, j, k: (0, j)),    # bias tile
            ],
            out_specs=pl.BlockSpec((tm, tn), lambda i, j, k: (i, j)),
            scratch_shapes=[pltpu.VMEM((tm, tn), jnp.float32)],
        ),
        compiler_params=pltpu.CompilerParams(
            dimension_semantics=("parallel", "parallel", "arbitrary"),
            vmem_limit_bytes=vmem_limit_bytes),
    )(x, w, b)
    if (Mp, Np) != (M, N):
        out = out[:M, :N]
    return out


# ----------------------------------------------------------------------------
# LSTM recurrence kernel.  Input projection is already folded into xp
# (xp[t] = x[t] @ W_ih^T + b_ih + b_hh); per timestep only h @ W_hh^T remains.
# Grid = (batch_tiles, time_chunks); h/c carried in f32 VMEM scratch.
# Gate order follows PyTorch: [i, f, g, o] (i|f contiguous -> one fused sigmoid).
# ----------------------------------------------------------------------------
def _lstm_rec_kernel(xp_ref, whh_ref, h0_ref, c0_ref,
                     y_ref, hT_ref, cT_ref, h_sc, c_sc, *,
                     nhid, t_chunk, unroll, act_dtype):
    t_blk = pl.program_id(1)

    @pl.when(t_blk == 0)
    def _():
        h_sc[...] = h0_ref[...]
        c_sc[...] = c0_ref[...]

    whh = whh_ref[...]                          # (nhid, 4*nhid), lane-dense RHS

    def step(tt, carry):
        h = h_sc[...]                           # (bt, nhid) f32
        c = c_sc[...]
        gates = (xp_ref[tt].astype(jnp.float32)
                 + jnp.dot(h.astype(whh.dtype), whh,
                           preferred_element_type=jnp.float32))
        # Gate nonlinearities in bf16 (EUP relief); state math stays f32.
        act = gates.astype(act_dtype)
        if_g = jax.nn.sigmoid(act[:, 0:2 * nhid])       # fused [i|f] sigmoid
        i_g = if_g[:, 0:nhid].astype(jnp.float32)
        f_g = if_g[:, nhid:2 * nhid].astype(jnp.float32)
        g_g = jnp.tanh(act[:, 2 * nhid:3 * nhid]).astype(jnp.float32)
        o_g = jax.nn.sigmoid(act[:, 3 * nhid:4 * nhid]).astype(jnp.float32)
        c_new = f_g * c + i_g * g_g
        h_new = o_g * jnp.tanh(c_new.astype(act_dtype)).astype(jnp.float32)
        h_sc[...] = h_new
        c_sc[...] = c_new
        y_ref[tt] = h_new.astype(y_ref.dtype)
        return carry

    lax.fori_loop(0, t_chunk, step, 0, unroll=unroll)

    @pl.when(t_blk == pl.num_programs(1) - 1)
    def _():
        hT_ref[...] = h_sc[...]
        cT_ref[...] = c_sc[...]


def lstm_layer(x, w_ih_t, w_hh_t, bias, h0, c0, *, t_chunk=16,
               compute_dtype=jnp.bfloat16,
               vmem_limit_bytes=DEFAULT_VMEM_LIMIT):
    """One LSTM layer over the whole sequence.

    x: (T, B, in_dim), w_ih_t: (in_dim, 4H), w_hh_t: (H, 4H), bias: (1, 4H),
    h0/c0: (B, H) f32.  Returns (y:(T,B,H) compute_dtype, hT:(B,H) f32, cT f32).
    """
    T, B, in_dim = x.shape
    nhid = h0.shape[-1]

    # Hoisted input projection: one big MXU matmul over all T*B rows (bf16 out).
    xp = matmul_bias(x.reshape(T * B, in_dim), w_ih_t, bias,
                     compute_dtype=compute_dtype, out_dtype=compute_dtype,
                     vmem_limit_bytes=vmem_limit_bytes)
    xp = xp.reshape(T, B, 4 * nhid)

    tc = _pick_tile(T, t_chunk)

    # Only split the batch across TensorCores when >1 TC exists (v7x) and the
    # per-core tile keeps the MXU LHS tall enough; never on 1-TC v5e/v6e.
    bt = B
    if (_num_tensorcores() >= 2 and B % 2 == 0
            and (B // 2) % 8 == 0 and (B // 2) >= 64):
        bt = B // 2

    w_hh_c = w_hh_t.astype(compute_dtype)
    act_dtype = jnp.bfloat16 if compute_dtype == jnp.bfloat16 else jnp.float32
    unroll = True if nhid < 1024 else 4   # cap unroll at large nhid (64 vregs)

    # W_hh^T has a constant index_map; for large resident weights request
    # single buffering to halve its VMEM footprint (critical on v7x's 64 MiB).
    whh_bytes = nhid * 4 * nhid * jnp.dtype(compute_dtype).itemsize
    if whh_bytes >= (8 << 20):
        whh_spec = pl.BlockSpec((nhid, 4 * nhid), lambda b, t: (0, 0),
                                pipeline_mode=pl.Buffered(1))
    else:
        whh_spec = pl.BlockSpec((nhid, 4 * nhid), lambda b, t: (0, 0))

    kernel = functools.partial(_lstm_rec_kernel, nhid=nhid, t_chunk=tc,
                               unroll=unroll, act_dtype=act_dtype)
    y, hT, cT = pl.pallas_call(
        kernel,
        out_shape=(
            jax.ShapeDtypeStruct((T, B, nhid), compute_dtype),
            jax.ShapeDtypeStruct((B, nhid), jnp.float32),
            jax.ShapeDtypeStruct((B, nhid), jnp.float32),
        ),
        grid_spec=pltpu.PrefetchScalarGridSpec(
            num_scalar_prefetch=0,
            grid=(B // bt, T // tc),
            in_specs=[
                pl.BlockSpec((tc, bt, 4 * nhid), lambda b, t: (t, b, 0)),  # xp
                whh_spec,                                                   # W_hh^T
                pl.BlockSpec((bt, nhid), lambda b, t: (b, 0)),              # h0
                pl.BlockSpec((bt, nhid), lambda b, t: (b, 0)),              # c0
            ],
            out_specs=[
                pl.BlockSpec((tc, bt, nhid), lambda b, t: (t, b, 0)),       # y
                pl.BlockSpec((bt, nhid), lambda b, t: (b, 0)),              # hT
                pl.BlockSpec((bt, nhid), lambda b, t: (b, 0)),              # cT
            ],
            scratch_shapes=[
                pltpu.VMEM((bt, nhid), jnp.float32),   # h state (f32 carry)
                pltpu.VMEM((bt, nhid), jnp.float32),   # c state (f32 carry)
            ],
        ),
        compiler_params=pltpu.CompilerParams(
            dimension_semantics=("parallel", "arbitrary"),
            vmem_limit_bytes=vmem_limit_bytes),
    )(xp, w_hh_c, h0, c0)
    return y, hT, cT


# ----------------------------------------------------------------------------
# Parameters (PyTorch init semantics; weights stored pre-transposed, f32 master).
# ----------------------------------------------------------------------------
def init_params(key, ntokens, ninp, nhid, nlayers):
    initrange = 0.1
    keys = jax.random.split(key, 2 + 4 * nlayers)
    encoder_w = jax.random.uniform(keys[0], (ntokens, ninp),
                                   minval=-initrange, maxval=initrange,
                                   dtype=jnp.float32)
    decoder_w = jax.random.uniform(keys[1], (ntokens, nhid),
                                   minval=-initrange, maxval=initrange,
                                   dtype=jnp.float32)
    params = {
        "encoder_w": encoder_w,
        "decoder_w_t": decoder_w.T,                    # (nhid, ntokens)
        "decoder_b": jnp.zeros((1, ntokens), jnp.float32),
        "lstm": [],
    }
    stdv = 1.0 / float(nhid) ** 0.5                    # PyTorch nn.LSTM default
    for l in range(nlayers):
        in_dim = ninp if l == 0 else nhid
        k = keys[2 + 4 * l: 2 + 4 * (l + 1)]
        w_ih = jax.random.uniform(k[0], (4 * nhid, in_dim),
                                  minval=-stdv, maxval=stdv, dtype=jnp.float32)
        w_hh = jax.random.uniform(k[1], (4 * nhid, nhid),
                                  minval=-stdv, maxval=stdv, dtype=jnp.float32)
        b_ih = jax.random.uniform(k[2], (4 * nhid,),
                                  minval=-stdv, maxval=stdv, dtype=jnp.float32)
        b_hh = jax.random.uniform(k[3], (4 * nhid,),
                                  minval=-stdv, maxval=stdv, dtype=jnp.float32)
        params["lstm"].append({
            "w_ih_t": w_ih.T,                          # (in_dim, 4H)
            "w_hh_t": w_hh.T,                          # (H, 4H)
            "b": (b_ih + b_hh).reshape(1, 4 * nhid),
        })
    return params


# ----------------------------------------------------------------------------
# Full RNNModel forward (eval mode: dropout = identity).
# ----------------------------------------------------------------------------
def rnn_model_forward(params, token_ids, hidden, *, compute_dtype=jnp.bfloat16):
    """token_ids: (T, B) int32; hidden: (h0, c0) each (nlayers, B, nhid) f32."""
    h0_all, c0_all = hidden
    # Embedding lookup: plain JAX gather (glue). Dropout = identity (eval).
    emb = jnp.take(params["encoder_w"], token_ids, axis=0)   # (T, B, ninp)

    x = emb
    hs, cs = [], []
    for l, lp in enumerate(params["lstm"]):
        x, hT, cT = lstm_layer(x, lp["w_ih_t"], lp["w_hh_t"], lp["b"],
                               h0_all[l], c0_all[l],
                               compute_dtype=compute_dtype)
        hs.append(hT)
        cs.append(cT)

    T, B, nhid = x.shape
    # Decoder logits emitted in compute_dtype (bf16): largest HBM write halved.
    logits2d = matmul_bias(x.reshape(T * B, nhid),
                           params["decoder_w_t"], params["decoder_b"],
                           compute_dtype=compute_dtype, out_dtype=compute_dtype)
    decoded = logits2d.reshape(T, B, -1)
    return decoded, (jnp.stack(hs, axis=0), jnp.stack(cs, axis=0))


# ----------------------------------------------------------------------------
# Pure-JAX f32 reference for correctness checking.
# ----------------------------------------------------------------------------
def _reference_forward(params, token_ids, hidden):
    h0_all, c0_all = hidden
    emb = jnp.take(params["encoder_w"], token_ids, axis=0)
    x = emb
    hs, cs = [], []
    for l, lp in enumerate(params["lstm"]):
        nhid = lp["w_hh_t"].shape[0]
        h, c = h0_all[l], c0_all[l]
        ys = []
        for t in range(x.shape[0]):
            gates = x[t] @ lp["w_ih_t"] + h @ lp["w_hh_t"] + lp["b"]
            i_g = jax.nn.sigmoid(gates[:, 0 * nhid:1 * nhid])
            f_g = jax.nn.sigmoid(gates[:, 1 * nhid:2 * nhid])
            g_g = jnp.tanh(gates[:, 2 * nhid:3 * nhid])
            o_g = jax.nn.sigmoid(gates[:, 3 * nhid:4 * nhid])
            c = f_g * c + i_g * g_g
            h = o_g * jnp.tanh(c)
            ys.append(h)
        x = jnp.stack(ys, axis=0)
        hs.append(h)
        cs.append(c)
    T, B, nhid = x.shape
    logits = x.reshape(T * B, nhid) @ params["decoder_w_t"] + params["decoder_b"]
    return logits.reshape(T, B, -1), (jnp.stack(hs, 0), jnp.stack(cs, 0))


if __name__ == "__main__":
    # Small but TPU-aligned shapes (B multiple of 8, nhid multiple of 128).
    ntokens, ninp, nhid, nlayers = 256, 128, 128, 2
    T, B = 16, 8

    key = jax.random.PRNGKey(0)
    pkey, ikey = jax.random.split(key)
    params = init_params(pkey, ntokens, ninp, nhid, nlayers)

    token_ids = jax.random.randint(ikey, (T, B), 0, ntokens, dtype=jnp.int32)
    # init_hidden(bsz): learnable zeros broadcast over batch.
    h0 = jnp.zeros((nlayers, B, nhid), jnp.float32)
    c0 = jnp.zeros((nlayers, B, nhid), jnp.float32)

    decoded, (hT, cT) = rnn_model_forward(params, token_ids, (h0, c0))
    jax.block_until_ready((decoded, hT, cT))

    assert decoded.shape == (T, B, ntokens)
    assert hT.shape == (nlayers, B, nhid) and cT.shape == (nlayers, B, nhid)

    # Correctness check against a pure-JAX f32 reference.  Kernel runs with
    # bf16 matmul operands / bf16 gate activations / bf16 logits (f32
    # accumulation and f32 cell state), so tolerances reflect bf16 rounding.
    ref_dec, (ref_h, ref_c) = _reference_forward(params, token_ids, (h0, c0))
    assert float(jnp.max(jnp.abs(decoded.astype(jnp.float32) - ref_dec))) < 1.2e-1
    assert float(jnp.max(jnp.abs(hT - ref_h))) < 6e-2
    assert float(jnp.max(jnp.abs(cT - ref_c))) < 6e-2

    print("KERNEL_OK")
</pallas_src>

<mosaic_0001>
module attributes {stable_mosaic.version = 11 : i64} {
  func.func @_matmul_bias_kernel(%arg0: i32, %arg1: i32, %arg2: i32, %arg3: memref<128x128xbf16, #tpu.memory_space<vmem>>, %arg4: memref<128x512xbf16, #tpu.memory_space<vmem>>, %arg5: memref<1x512xf32, #tpu.memory_space<vmem>>, %arg6: memref<128x512xbf16, #tpu.memory_space<vmem>>, %arg7: memref<128x512xf32, #tpu.memory_space<vmem>>) attributes {dimension_semantics = [#tpu.dimension_semantics<parallel>, #tpu.dimension_semantics<parallel>, #tpu.dimension_semantics<arbitrary>], iteration_bounds = array<i64: 1, 1, 1>, scalar_prefetch = 0 : i64, scratch_operands = 1 : i64, tpu.core_type = #tpu.core_type<tc>, window_params = [{transform_indices = @transform_0, window_bounds = array<i64: 128, 128>}, {transform_indices = @transform_1, window_bounds = array<i64: 128, 512>}, {transform_indices = @transform_2, window_bounds = array<i64: 1, 512>}, {transform_indices = @transform_3, window_bounds = array<i64: 128, 512>}]} {
    %c0_i32 = arith.constant 0 : i32
    %0 = arith.cmpi eq, %arg2, %c0_i32 : i32
    %1 = arith.extui %0 : i1 to i32
    %c0_i32_0 = arith.constant 0 : i32
    %2 = arith.cmpi ne, %1, %c0_i32_0 : i32
    scf.if %2 {
      %cst_10 = arith.constant 0.000000e+00 : f32
      %12 = vector.broadcast %cst_10 : f32 to vector<128x512xf32>
      %c0_11 = arith.constant 0 : index
      %c0_12 = arith.constant 0 : index
      %13 = vector.load %arg7[%c0_11, %c0_12] : memref<128x512xf32, #tpu.memory_space<vmem>>, vector<128x512xf32>
      tpu.vector_store %arg7[%c0_11, %c0_12], %12 {strides = array<i32>} : memref<128x512xf32, #tpu.memory_space<vmem>>, vector<128x512xf32>,
    } else {
    }
    %c0 = arith.constant 0 : index
    %c0_1 = arith.constant 0 : index
    %3 = vector.load %arg7[%c0, %c0_1] : memref<128x512xf32, #tpu.memory_space<vmem>>, vector<128x512xf32>
    %c0_2 = arith.constant 0 : index
    %c0_3 = arith.constant 0 : index
    %4 = vector.load %arg3[%c0_2, %c0_3] : memref<128x128xbf16, #tpu.memory_space<vmem>>, vector<128x128xbf16>
    %c0_4 = arith.constant 0 : index
    %c0_5 = arith.constant 0 : index
    %5 = vector.load %arg4[%c0_4, %c0_5] : memref<128x512xbf16, #tpu.memory_space<vmem>>, vector<128x512xbf16>
    %cst = arith.constant dense<0.000000e+00> : vector<128x512xf32>
    %6 = tpu.matmul %4, %5, %cst {dimension_numbers = #tpu.dot_dimension_numbers<[1], [0], [0], [1], [0, 0, 1, 1], [], []>} : vector<128x128xbf16>, vector<128x512xbf16>, vector<128x512xf32> -> vector<128x512xf32>
    %7 = arith.addf %3, %6 : vector<128x512xf32>
    %c0_6 = arith.constant 0 : index
    %c0_7 = arith.constant 0 : index
    %8 = vector.load %arg7[%c0_6, %c0_7] : memref<128x512xf32, #tpu.memory_space<vmem>>, vector<128x512xf32>
    tpu.vector_store %arg7[%c0_6, %c0_7], %7 {strides = array<i32>} : memref<128x512xf32, #tpu.memory_space<vmem>>, vector<128x512xf32>,
    %c0_i32_8 = arith.constant 0 : i32
    %9 = arith.cmpi eq, %arg2, %c0_i32_8 : i32
    %10 = arith.extui %9 : i1 to i32
    %c0_i32_9 = arith.constant 0 : i32
    %11 = arith.cmpi ne, %10, %c0_i32_9 : i32
    scf.if %11 {
      %c0_10 = arith.constant 0 : index
      %c0_11 = arith.constant 0 : index
      %12 = vector.load %arg7[%c0_10, %c0_11] : memref<128x512xf32, #tpu.memory_space<vmem>>, vector<128x512xf32>
      %c0_12 = arith.constant 0 : index
      %c0_13 = arith.constant 0 : index
      %13 = vector.load %arg5[%c0_12, %c0_13] : memref<1x512xf32, #tpu.memory_space<vmem>>, vector<1x512xf32>
      %14 = vector.broadcast %13 : vector<1x512xf32> to vector<128x512xf32>
      %15 = arith.addf %12, %14 : vector<128x512xf32>
      %16 = arith.truncf %15 : vector<128x512xf32> to vector<128x512xbf16>
      %c0_14 = arith.constant 0 : index
      %c0_15 = arith.constant 0 : index
      %17 = vector.load %arg6[%c0_14, %c0_15] : memref<128x512xbf16, #tpu.memory_space<vmem>>, vector<128x512xbf16>
      tpu.vector_store %arg6[%c0_14, %c0_15], %16 {strides = array<i32>} : memref<128x512xbf16, #tpu.memory_space<vmem>>, vector<128x512xbf16>,
    } else {
    }
    return
  }
  func.func @transform_0(%arg0: i32, %arg1: i32, %arg2: i32) -> (i32, i32) {
    %c0_i32 = arith.constant 0 : i32
    return %arg0, %arg2 : i32, i32
  }
  func.func @transform_1(%arg0: i32, %arg1: i32, %arg2: i32) -> (i32, i32) {
    %c0_i32 = arith.constant 0 : i32
    return %arg2, %arg1 : i32, i32
  }
  func.func @transform_2(%arg0: i32, %arg1: i32, %arg2: i32) -> (i32, i32) {
    %c0_i32 = arith.constant 0 : i32
    %c0_i32_0 = arith.constant 0 : i32
    return %c0_i32, %arg1 : i32, i32
  }
  func.func @transform_3(%arg0: i32, %arg1: i32, %arg2: i32) -> (i32, i32) {
    %c0_i32 = arith.constant 0 : i32
    return %arg0, %arg1 : i32, i32
  }
}

</mosaic_0001>

<llo_original>
// kernel: tpu_custom_call.1
$region0: #{tpu_custom_call.1}
  #allocation0 [shape = 'u32[]', space=smem, size = 0x4, offset = 0x4, fixed_abs, tag = 'smem constant byte address 0x4 - core index']
  #allocation1 [shape = 'u32[72,128]{1,0:T(1,128)}', space=vmem, size = 0x9000, scoped, tag = 'internal scratch']
  #allocation2 [shape = 'f32[128,512]{1,0:T(8,128)}', space=vmem, size = 0x40000, scoped, tag = 'scratch operand']
  %s0 = inlined_call_operand.hbm [shape: bf16[128,128], index: 0, kind: input, shape index: {}]
  %s1 = inlined_call_operand.hbm [shape: bf16[128,512], index: 1, kind: input, shape index: {}]
  %s2 = inlined_call_operand.hbm [shape: f32[1,512], index: 2, kind: input, shape index: {}]
  %s3 = inlined_call_operand.hbm [shape: bf16[128,512], index: 3, kind: output, shape index: {}]
  %s4 = sld [smem:[#allocation0]]
  $region42: #{tpu_custom_call.1} parent=0
    _
  %s6 = ssub.s32 1, %s4
  %s7 = scalar_select 0, %s6, %s4
  $region1: #{tpu_custom_call.1} parent=0
    #allocation3 [shape = 'u8[32768]{0}', space=vmem, size = 0x8000, scoped, tag = 'input window, operand 0, single buffered']
    #allocation4 [shape = 's32[1]{0}', space=sflag, size = 0x4, scoped, tag = 'scoped memory for tpu_custom_call.1']
    #allocation5 [shape = 's32[1]{0}', space=sflag, size = 0x4, scoped, tag = 'scoped memory for tpu_custom_call.1']
    #allocation6 [shape = 'u8[131072]{0}', space=vmem, size = 0x20000, scoped, tag = 'input window, operand 1, single buffered']
    #allocation7 [shape = 's32[1]{0}', space=sflag, size = 0x4, scoped, tag = 'scoped memory for tpu_custom_call.1']
    #allocation8 [shape = 'u8[2048]{0}', space=vmem, size = 0x800, scoped, tag = 'input window, operand 2, single buffered']
    #allocation9 [shape = 'u8[131072]{0}', space=vmem, size = 0x20000, scoped, tag = 'output window, operand 0, single buffered']
    %8 = vsyncpa [#allocation4], 0
    %9 = vsyncpa [#allocation7], 0
    %10 = vsyncpa [#allocation5], 0
    // Predicated region
    $region2: #{tpu_custom_call.1} parent=1 // pred_check
      _
    $region3: #{tpu_custom_call.1} parent=1 // pred_check_branch
      %12 = sbr.rel (0) target = $region5
    $region4: #{tpu_custom_call.1} parent=1 // pred_region
      %14 = vsyncadd [#allocation4], 0
      %s15 = sshll.u32 %s0, 4
      %s16 = int_to_ptr.hbm [resolvable:$true] %s15
      %s17 = sshll.u32 [#allocation3], 4
      %s18 = int_to_ptr.vmem [resolvable:$true] %s17
      %23 = dma.hbm_to_vmem [thread:$0]  %s16, 1024, %s18, [#allocation4], 64, 64, 4
    $region5: #{tpu_custom_call.1} parent=1 // pred_fallthru
      _
    // Predicated region
    $region6: #{tpu_custom_call.1} parent=1 // pred_check
      _
    $region7: #{tpu_custom_call.1} parent=1 // pred_check_branch
      %25 = sbr.rel (0) target = $region9
    $region8: #{tpu_custom_call.1} parent=1 // pred_region
      %27 = vsyncadd [#allocation7], 0
      %s28 = sshll.u32 %s1, 4
      %s29 = int_to_ptr.hbm [resolvable:$true] %s28
      %s30 = sshll.u32 [#allocation6], 4
      %s31 = int_to_ptr.vmem [resolvable:$true] %s30
      %36 = dma.hbm_to_vmem [thread:$0]  %s29, 4096, %s31, [#allocation7], 256, 256, 16
    $region9: #{tpu_custom_call.1} parent=1 // pred_fallthru
      _
    // Predicated region
    $region10: #{tpu_custom_call.1} parent=1 // pred_check
      _
    $region11: #{tpu_custom_call.1} parent=1 // pred_check_branch
      %38 = sbr.rel (0) target = $region13
    $region12: #{tpu_custom_call.1} parent=1 // pred_region
      %40 = vsyncadd [#allocation7], 0
      %s42 = sshll.u32 %s2, 4
      %s43 = int_to_ptr.hbm [resolvable:$true] %s42
      %s44 = sshll.u32 [#allocation8], 4
      %s45 = int_to_ptr.vmem [resolvable:$true] %s44
      %47 = dma.hbm_to_vmem [thread:$0]  %s43, 64, %s45, [#allocation7]
    $region13: #{tpu_custom_call.1} parent=1 // pred_fallthru
      _
    // Predicated region
    $region14: #{tpu_custom_call.1} parent=1 // pred_check
      _
    $region15: #{tpu_custom_call.1} parent=1 // pred_check_branch
      %49 = sbr.rel (0) target = $region17
    $region16: #{tpu_custom_call.1} parent=1 // pred_region
      %51 = dma.done [#allocation4], 1024
    $region17: #{tpu_custom_call.1} parent=1 // pred_fallthru
      _
    // Predicated region
    $region18: #{tpu_custom_call.1} parent=1 // pred_check
      _
    $region19: #{tpu_custom_call.1} parent=1 // pred_check_branch
      %53 = sbr.rel (0) target = $region21
    $region20: #{tpu_custom_call.1} parent=1 // pred_region
      %55 = dma.done [#allocation7], 4096
    $region21: #{tpu_custom_call.1} parent=1 // pred_fallthru
      _
    // Predicated region
    $region22: #{tpu_custom_call.1} parent=1 // pred_check
      _
    $region23: #{tpu_custom_call.1} parent=1 // pred_check_branch
      %57 = sbr.rel (0) target = $region25
    $region24: #{tpu_custom_call.1} parent=1 // pred_region
      %59 = dma.done [#allocation7], 64
    $region25: #{tpu_custom_call.1} parent=1 // pred_fallthru
      _
    %p60 = scmp.eq.s32.totalorder 0, 0
    // Predicated region
    $region26: #{tpu_custom_call.1} parent=1 // pred_check
      %p61 = pneg %p60
    $region27: #{tpu_custom_call.1} parent=1 // pred_check_branch
      %63 = sbr.rel (%p61) target = $region29
    $region28: #{tpu_custom_call.1} parent=1 // pred_region
      %64 = vst [vmem:[#allocation2] sm:$0xff] 0.0
      %65 = vst [vmem:[#allocation2 + $0x8] sm:$0xff] 0.0
      %66 = vst [vmem:[#allocation2 + $0x10] sm:$0xff] 0.0
      %67 = vst [vmem:[#allocation2 + $0x18] sm:$0xff] 0.0
      %68 = vst [vmem:[#allocation2 + $0x20] sm:$0xff] 0.0
      %69 = vst [vmem:[#allocation2 + $0x28] sm:$0xff] 0.0
      %70 = vst [vmem:[#allocation2 + $0x30] sm:$0xff] 0.0
      %71 = vst [vmem:[#allocation2 + $0x38] sm:$0xff] 0.0
      %72 = vst [vmem:[#allocation2 + $0x40] sm:$0xff] 0.0
      %73 = vst [vmem:[#allocation2 + $0x48] sm:$0xff] 0.0
      %74 = vst [vmem:[#allocation2 + $0x50] sm:$0xff] 0.0
      %75 = vst [vmem:[#allocation2 + $0x58] sm:$0xff] 0.0
      %76 = vst [vmem:[#allocation2 + $0x60] sm:$0xff] 0.0
      %77 = vst [vmem:[#allocation2 + $0x68] sm:$0xff] 0.0
      %78 = vst [vmem:[#allocation2 + $0x70] sm:$0xff] 0.0
      %79 = vst [vmem:[#allocation2 + $0x78] sm:$0xff] 0.0
      %80 = vst [vmem:[#allocation2 + $0x80] sm:$0xff] 0.0
      %81 = vst [vmem:[#allocation2 + $0x88] sm:$0xff] 0.0
      %82 = vst [vmem:[#allocation2 + $0x90] sm:$0xff] 0.0
      %83 = vst [vmem:[#allocation2 + $0x98] sm:$0xff] 0.0
      %84 = vst [vmem:[#allocation2 + $0xa0] sm:$0xff] 0.0
      %85 = vst [vmem:[#allocation2 + $0xa8] sm:$0xff] 0.0
      %86 = vst [vmem:[#allocation2 + $0xb0] sm:$0xff] 0.0
      %87 = vst [vmem:[#allocation2 + $0xb8] sm:$0xff] 0.0
      %88 = vst [vmem:[#allocation2 + $0xc0] sm:$0xff] 0.0
      %89 = vst [vmem:[#allocation2 + $0xc8] sm:$0xff] 0.0
      %90 = vst [vmem:[#allocation2 + $0xd0] sm:$0xff] 0.0
      %91 = vst [vmem:[#allocation2 + $0xd8] sm:$0xff] 0.0
      %92 = vst [vmem:[#allocation2 + $0xe0] sm:$0xff] 0.0
      %93 = vst [vmem:[#allocation2 + $0xe8] sm:$0xff] 0.0
      %94 = vst [vmem:[#allocation2 + $0xf0] sm:$0xff] 0.0
      %95 = vst [vmem:[#allocation2 + $0xf8] sm:$0xff] 0.0
      %96 = vst [vmem:[#allocation2 + $0x100] sm:$0xff] 0.0
      %97 = vst [vmem:[#allocation2 + $0x108] sm:$0xff] 0.0
      %98 = vst [vmem:[#allocation2 + $0x110] sm:$0xff] 0.0
      %99 = vst [vmem:[#allocation2 + $0x118] sm:$0xff] 0.0
      %100 = vst [vmem:[#allocation2 + $0x120] sm:$0xff] 0.0
      %101 = vst [vmem:[#allocation2 + $0x128] sm:$0xff] 0.0
      %102 = vst [vmem:[#allocation2 + $0x130] sm:$0xff] 0.0
      %103 = vst [vmem:[#allocation2 + $0x138] sm:$0xff] 0.0
      %104 = vst [vmem:[#allocation2 + $0x140] sm:$0xff] 0.0
      %105 = vst [vmem:[#allocation2 + $0x148] sm:$0xff] 0.0
      %106 = vst [vmem:[#allocation2 + $0x150] sm:$0xff] 0.0
      %107 = vst [vmem:[#allocation2 + $0x158] sm:$0xff] 0.0
      %108 = vst [vmem:[#allocation2 + $0x160] sm:$0xff] 0.0
      %109 = vst [vmem:[#allocation2 + $0x168] sm:$0xff] 0.0
      %110 = vst [vmem:[#allocation2 + $0x170] sm:$0xff] 0.0
      %111 = vst [vmem:[#allocation2 + $0x178] sm:$0xff] 0.0
      %112 = vst [vmem:[#allocation2 + $0x180] sm:$0xff] 0.0
      %113 = vst [vmem:[#allocation2 + $0x188] sm:$0xff] 0.0
      %114 = vst [vmem:[#allocation2 + $0x190] sm:$0xff] 0.0
      %115 = vst [vmem:[#allocation2 + $0x198] sm:$0xff] 0.0
      %116 = vst [vmem:[#allocation2 + $0x1a0] sm:$0xff] 0.0
      %117 = vst [vmem:[#allocation2 + $0x1a8] sm:$0xff] 0.0
      %118 = vst [vmem:[#allocation2 + $0x1b0] sm:$0xff] 0.0
      %119 = vst [vmem:[#allocation2 + $0x1b8] sm:$0xff] 0.0
      %120 = vst [vmem:[#allocation2 + $0x1c0] sm:$0xff] 0.0
      %121 = vst [vmem:[#allocation2 + $0x1c8] sm:$0xff] 0.0
      %122 = vst [vmem:[#allocation2 + $0x1d0] sm:$0xff] 0.0
      %123 = vst [vmem:[#allocation2 + $0x1d8] sm:$0xff] 0.0
      %124 = vst [vmem:[#allocation2 + $0x1e0] sm:$0xff] 0.0
      %125 = vst [vmem:[#allocation2 + $0x1e8] sm:$0xff] 0.0
      %126 = vst [vmem:[#allocation2 + $0x1f0] sm:$0xff] 0.0
      %127 = vst [vmem:[#allocation2 + $0x1f8] sm:$0xff] 0.0
    $region29: #{tpu_custom_call.1} parent=1 // pred_fallthru
      _
    %v128 = vld [vmem:[#allocation2] sm:$0xff]
    %v129 = vld [vmem:[#allocation2 + $0x8] sm:$0xff]
    %v130 = vld [vmem:[#allocation2 + $0x10] sm:$0xff]
    %v131 = vld [vmem:[#allocation2 + $0x18] sm:$0xff]
    %v132 = vld [vmem:[#allocation2 + $0x20] sm:$0xff]
    %v133 = vld [vmem:[#allocation2 + $0x28] sm:$0xff]
    %v134 = vld [vmem:[#allocation2 + $0x30] sm:$0xff]
    %v135 = vld [vmem:[#allocation2 + $0x38] sm:$0xff]
    %v136 = vld [vmem:[#allocation2 + $0x40] sm:$0xff]
    %v137 = vld [vmem:[#allocation2 + $0x48] sm:$0xff]
    %v138 = vld [vmem:[#allocation2 + $0x50] sm:$0xff]
    %v139 = vld [vmem:[#allocation2 + $0x58] sm:$0xff]
    %v140 = vld [vmem:[#allocation2 + $0x60] sm:$0xff]
    %v141 = vld [vmem:[#allocation2 + $0x68] sm:$0xff]
    %v142 = vld [vmem:[#allocation2 + $0x70] sm:$0xff]
    %v143 = vld [vmem:[#allocation2 + $0x78] sm:$0xff]
    %v144 = vld [vmem:[#allocation2 + $0x80] sm:$0xff]
    %v145 = vld [vmem:[#allocation2 + $0x88] sm:$0xff]
    %v146 = vld [vmem:[#allocation2 + $0x90] sm:$0xff]
    %v147 = vld [vmem:[#allocation2 + $0x98] sm:$0xff]
    %v148 = vld [vmem:[#allocation2 + $0xa0] sm:$0xff]
    %v149 = vld [vmem:[#allocation2 + $0xa8] sm:$0xff]
    %v150 = vld [vmem:[#allocation2 + $0xb0] sm:$0xff]
    %v151 = vld [vmem:[#allocation2 + $0xb8] sm:$0xff]
    %v152 = vld [vmem:[#allocation2 + $0xc0] sm:$0xff]
    %v153 = vld [vmem:[#allocation2 + $0xc8] sm:$0xff]
    %v154 = vld [vmem:[#allocation2 + $0xd0] sm:$0xff]
    %v155 = vld [vmem:[#allocation2 + $0xd8] sm:$0xff]
    %v156 = vld [vmem:[#allocation2 + $0xe0] sm:$0xff]
    %v157 = vld [vmem:[#allocation2 + $0xe8] sm:$0xff]
    %v158 = vld [vmem:[#allocation2 + $0xf0] sm:$0xff]
    %v159 = vld [vmem:[#allocation2 + $0xf8] sm:$0xff]
    %v160 = vld [vmem:[#allocation2 + $0x100] sm:$0xff]
    %v161 = vld [vmem:[#allocation2 + $0x108] sm:$0xff]
    %v162 = vld [vmem:[#allocation2 + $0x110] sm:$0xff]
    %v163 = vld [vmem:[#allocation2 + $0x118] sm:$0xff]
    %v164 = vld [vmem:[#allocation2 + $0x120] sm:$0xff]
    %v165 = vld [vmem:[#allocation2 + $0x128] sm:$0xff]
    %v166 = vld [vmem:[#allocation2 + $0x130] sm:$0xff]
    %v167 = vld [vmem:[#allocation2 + $0x138] sm:$0xff]
    %v168 = vld [vmem:[#allocation2 + $0x140] sm:$0xff]
    %v169 = vld [vmem:[#allocation2 + $0x148] sm:$0xff]
    %v170 = vld [vmem:[#allocation2 + $0x150] sm:$0xff]
    %v171 = vld [vmem:[#allocation2 + $0x158] sm:$0xff]
    %v172 = vld [vmem:[#allocation2 + $0x160] sm:$0xff]
    %v173 = vld [vmem:[#allocation2 + $0x168] sm:$0xff]
    %v174 = vld [vmem:[#allocation2 + $0x170] sm:$0xff]
    %v175 = vld [vmem:[#allocation2 + $0x178] sm:$0xff]
    %v176 = vld [vmem:[#allocation2 + $0x180] sm:$0xff]
    %v177 = vld [vmem:[#allocation2 + $0x188] sm:$0xff]
    %v178 = vld [vmem:[#allocation2 + $0x190] sm:$0xff]
    %v179 = vld [vmem:[#allocation2 + $0x198] sm:$0xff]
    %v180 = vld [vmem:[#allocation2 + $0x1a0] sm:$0xff]
    %v181 = vld [vmem:[#allocation2 + $0x1a8] sm:$0xff]
    %v182 = vld [vmem:[#allocation2 + $0x1b0] sm:$0xff]
    %v183 = vld [vmem:[#allocation2 + $0x1b8] sm:$0xff]
    %v184 = vld [vmem:[#allocation2 + $0x1c0] sm:$0xff]
    %v185 = vld [vmem:[#allocation2 + $0x1c8] sm:$0xff]
    %v186 = vld [vmem:[#allocation2 + $0x1d0] sm:$0xff]
    %v187 = vld [vmem:[#allocation2 + $0x1d8] sm:$0xff]
    %v188 = vld [vmem:[#allocation2 + $0x1e0] sm:$0xff]
    %v189 = vld [vmem:[#allocation2 + $0x1e8] sm:$0xff]
    %v190 = vld [vmem:[#allocation2 + $0x1f0] sm:$0xff]
    %v191 = vld [vmem:[#allocation2 + $0x1f8] sm:$0xff]
    %v192 = vld [vmem:[#allocation3] sm:$0xf]
    %v193 = vld [vmem:[#allocation3 + $0x4] sm:$0xf]
    %v194 = vld [vmem:[#allocation3 + $0x8] sm:$0xf]
    %v195 = vld [vmem:[#allocation3 + $0xc] sm:$0xf]
    %v196 = vld [vmem:[#allocation3 + $0x10] sm:$0xf]
    %v197 = vld [vmem:[#allocation3 + $0x14] sm:$0xf]
    %v198 = vld [vmem:[#allocation3 + $0x18] sm:$0xf]
    %v199 = vld [vmem:[#allocation3 + $0x1c] sm:$0xf]
    %v200 = vld [vmem:[#allocation3 + $0x20] sm:$0xf]
    %v201 = vld [vmem:[#allocation3 + $0x24] sm:$0xf]
    %v202 = vld [vmem:[#allocation3 + $0x28] sm:$0xf]
    %v203 = vld [vmem:[#allocation3 + $0x2c] sm:$0xf]
    %v204 = vld [vmem:[#allocation3 + $0x30] sm:$0xf]
    %v205 = vld [vmem:[#allocation3 + $0x34] sm:$0xf]
    %v206 = vld [vmem:[#allocation3 + $0x38] sm:$0xf]
    %v207 = vld [vmem:[#allocation3 + $0x3c] sm:$0xf]
    %v208 = vld [vmem:[#allocation6] sm:$0xff]
    %v209 = vld [vmem:[#allocation6 + $0x8] sm:$0xff]
    %v210 = vld [vmem:[#allocation6 + $0x10] sm:$0xff]
    %v211 = vld [vmem:[#allocation6 + $0x18] sm:$0xff]
    %v212 = vld [vmem:[#allocation6 + $0x20] sm:$0xff]
    %v213 = vld [vmem:[#allocation6 + $0x28] sm:$0xff]
    %v214 = vld [vmem:[#allocation6 + $0x30] sm:$0xff]
    %v215 = vld [vmem:[#allocation6 + $0x38] sm:$0xff]
    %v216 = vld [vmem:[#allocation6 + $0x40] sm:$0xff]
    %v217 = vld [vmem:[#allocation6 + $0x48] sm:$0xff]
    %v218 = vld [vmem:[#allocation6 + $0x50] sm:$0xff]
    %v219 = vld [vmem:[#allocation6 + $0x58] sm:$0xff]
    %v220 = vld [vmem:[#allocation6 + $0x60] sm:$0xff]
    %v221 = vld [vmem:[#allocation6 + $0x68] sm:$0xff]
    %v222 = vld [vmem:[#allocation6 + $0x70] sm:$0xff]
    %v223 = vld [vmem:[#allocation6 + $0x78] sm:$0xff]
    %v224 = vld [vmem:[#allocation6 + $0x80] sm:$0xff]
    %v225 = vld [vmem:[#allocation6 + $0x88] sm:$0xff]
    %v226 = vld [vmem:[#allocation6 + $0x90] sm:$0xff]
    %v227 = vld [vmem:[#allocation6 + $0x98] sm:$0xff]
    %v228 = vld [vmem:[#allocation6 + $0xa0] sm:$0xff]
    %v229 = vld [vmem:[#allocation6 + $0xa8] sm:$0xff]
    %v230 = vld [vmem:[#allocation6 + $0xb0] sm:$0xff]
    %v231 = vld [vmem:[#allocation6 + $0xb8] sm:$0xff]
    %v232 = vld [vmem:[#allocation6 + $0xc0] sm:$0xff]
    %v233 = vld [vmem:[#allocation6 + $0xc8] sm:$0xff]
    %v234 = vld [vmem:[#allocation6 + $0xd0] sm:$0xff]
    %v235 = vld [vmem:[#allocation6 + $0xd8] sm:$0xff]
    %v236 = vld [vmem:[#allocation6 + $0xe0] sm:$0xff]
    %v237 = vld [vmem:[#allocation6 + $0xe8] sm:$0xff]
    %v238 = vld [vmem:[#allocation6 + $0xf0] sm:$0xff]
    %v239 = vld [vmem:[#allocation6 + $0xf8] sm:$0xff]
    %v256 = vunpack.c.l.b16 %v192
    %v257 = vunpack.c.l.b16 %v193
    %v258 = vunpack.c.l.b16 %v194
    %v259 = vunpack.c.l.b16 %v195
    %v260 = vunpack.c.l.b16 %v196
    %v261 = vunpack.c.l.b16 %v197
    %v262 = vunpack.c.l.b16 %v198
    %v263 = vunpack.c.l.b16 %v199
    %v264 = vunpack.c.l.b16 %v200
    %v265 = vunpack.c.l.b16 %v201
    %v266 = vunpack.c.l.b16 %v202
    %v267 = vunpack.c.l.b16 %v203
    %v268 = vunpack.c.l.b16 %v204
    %v269 = vunpack.c.l.b16 %v205
    %v270 = vunpack.c.l.b16 %v206
    %v271 = vunpack.c.l.b16 %v207
    %v272 = vpack.c.b16 %v257, %v256
    %v273 = vpack.c.b16 %v259, %v258
    %v274 = vpack.c.b16 %v261, %v260
    %v275 = vpack.c.b16 %v263, %v262
    %v276 = vpack.c.b16 %v265, %v264
    %v277 = vpack.c.b16 %v267, %v266
    %v278 = vpack.c.b16 %v269, %v268
    %v279 = vpack.c.b16 %v271, %v270
    %v320 = vunpack.c.l.b16 %v208
    %v321 = vunpack.c.h.b16 %v208
    %v322 = vunpack.c.l.b16 %v209
    %v323 = vunpack.c.h.b16 %v209
    %v324 = vunpack.c.l.b16 %v210
    %v325 = vunpack.c.h.b16 %v210
    %v326 = vunpack.c.l.b16 %v211
    %v327 = vunpack.c.h.b16 %v211
    %v328 = vunpack.c.l.b16 %v212
    %v329 = vunpack.c.h.b16 %v212
    %v330 = vunpack.c.l.b16 %v213
    %v331 = vunpack.c.h.b16 %v213
    %v332 = vunpack.c.l.b16 %v214
    %v333 = vunpack.c.h.b16 %v214
    %v334 = vunpack.c.l.b16 %v215
    %v335 = vunpack.c.h.b16 %v215
    %v336 = vunpack.c.l.b16 %v216
    %v337 = vunpack.c.h.b16 %v216
    %v338 = vunpack.c.l.b16 %v217
    %v339 = vunpack.c.h.b16 %v217
    %v340 = vunpack.c.l.b16 %v218
    %v341 = vunpack.c.h.b16 %v218
    %v342 = vunpack.c.l.b16 %v219
    %v343 = vunpack.c.h.b16 %v219
    %v344 = vunpack.c.l.b16 %v220
    %v345 = vunpack.c.h.b16 %v220
    %v346 = vunpack.c.l.b16 %v221
    %v347 = vunpack.c.h.b16 %v221
    %v348 = vunpack.c.l.b16 %v222
    %v349 = vunpack.c.h.b16 %v222
    %v350 = vunpack.c.l.b16 %v223
    %v351 = vunpack.c.h.b16 %v223
    %v352 = vunpack.c.l.b16 %v224
    %v353 = vunpack.c.h.b16 %v224
    %v354 = vunpack.c.l.b16 %v225
    %v355 = vunpack.c.h.b16 %v225
    %v356 = vunpack.c.l.b16 %v226
    %v357 = vunpack.c.h.b16 %v226
    %v358 = vunpack.c.l.b16 %v227
    %v359 = vunpack.c.h.b16 %v227
    %v360 = vunpack.c.l.b16 %v228
    %v361 = vunpack.c.h.b16 %v228
    %v362 = vunpack.c.l.b16 %v229
    %v363 = vunpack.c.h.b16 %v229
    %v364 = vunpack.c.l.b16 %v230
    %v365 = vunpack.c.h.b16 %v230
    %v366 = vunpack.c.l.b16 %v231
    %v367 = vunpack.c.h.b16 %v231
    %v368 = vunpack.c.l.b16 %v232
    %v369 = vunpack.c.h.b16 %v232
    %v370 = vunpack.c.l.b16 %v233
    %v371 = vunpack.c.h.b16 %v233
    %v372 = vunpack.c.l.b16 %v234
    %v373 = vunpack.c.h.b16 %v234
    %v374 = vunpack.c.l.b16 %v235
    %v375 = vunpack.c.h.b16 %v235
    %v376 = vunpack.c.l.b16 %v236
    %v377 = vunpack.c.h.b16 %v236
    %v378 = vunpack.c.l.b16 %v237
    %v379 = vunpack.c.h.b16 %v237
    %v380 = vunpack.c.l.b16 %v238
    %v381 = vunpack.c.h.b16 %v238
    %v382 = vunpack.c.l.b16 %v239
    %v383 = vunpack.c.h.b16 %v239
    %v384 = vpack.c.b16 %v324, %v320
    %v385 = vpack.c.b16 %v325, %v321
    %v386 = vpack.c.b16 %v326, %v322
    %v387 = vpack.c.b16 %v327, %v323
    %v388 = vpack.c.b16 %v332, %v328
    %v389 = vpack.c.b16 %v333, %v329
    %v390 = vpack.c.b16 %v334, %v330
    %v391 = vpack.c.b16 %v335, %v331
    %v392 = vpack.c.b16 %v340, %v336
    %v393 = vpack.c.b16 %v341, %v337
    %v394 = vpack.c.b16 %v342, %v338
    %v395 = vpack.c.b16 %v343, %v339
    %v396 = vpack.c.b16 %v348, %v344
    %v397 = vpack.c.b16 %v349, %v345
    %v398 = vpack.c.b16 %v350, %v346
    %v399 = vpack.c.b16 %v351, %v347
    %v400 = vpack.c.b16 %v356, %v352
    %v401 = vpack.c.b16 %v357, %v353
    %v402 = vpack.c.b16 %v358, %v354
    %v403 = vpack.c.b16 %v359, %v355
    %v404 = vpack.c.b16 %v364, %v360
    %v405 = vpack.c.b16 %v365, %v361
    %v406 = vpack.c.b16 %v366, %v362
    %v407 = vpack.c.b16 %v367, %v363
    %v408 = vpack.c.b16 %v372, %v368
    %v409 = vpack.c.b16 %v373, %v369
    %v410 = vpack.c.b16 %v374, %v370
    %v411 = vpack.c.b16 %v375, %v371
    %v412 = vpack.c.b16 %v380, %v376
    %v413 = vpack.c.b16 %v381, %v377
    %v414 = vpack.c.b16 %v382, %v378
    %v415 = vpack.c.b16 %v383, %v379
    %448 = vmatpush.bf16.msra.mxu0 %v412
    %449 = vmatpush.bf16.msra.mxu0 %v408
    %450 = vmatpush.bf16.msra.mxu0 %v404
    %451 = vmatpush.bf16.msra.mxu0 %v400
    %452 = vmatpush.bf16.msra.mxu0 %v396
    %453 = vmatpush.bf16.msra.mxu0 %v392
    %454 = vmatpush.bf16.msra.mxu0 %v388
    %455 = vmatpush.bf16.msra.mxu0 %v384
    %456 = vmatmul.bf16.gmra.mxu0 %v272
    %v457 = vpop.f32.mrf.mxu0
    %v458 = vadd.f32 0.0, %v457
    %v459 = vpop.f32.mrf.mxu0
    %v460 = vadd.f32 0.0, %v459
    %461 = vmatmul.bf16.gmra.mxu0 %v273
    %v462 = vpop.f32.mrf.mxu0
    %v463 = vadd.f32 0.0, %v462
    %v464 = vpop.f32.mrf.mxu0
    %v465 = vadd.f32 0.0, %v464
    %466 = vmatmul.bf16.gmra.mxu0 %v274
    %v467 = vpop.f32.mrf.mxu0
    %v468 = vadd.f32 0.0, %v467
    %v469 = vpop.f32.mrf.mxu0
    %v470 = vadd.f32 0.0, %v469
    %471 = vmatmul.bf16.gmra.mxu0 %v275
    %v472 = vpop.f32.mrf.mxu0
    %v473 = vadd.f32 0.0, %v472
    %v474 = vpop.f32.mrf.mxu0
    %v475 = vadd.f32 0.0, %v474
    %476 = vmatmul.bf16.gmra.mxu0 %v276
    %v477 = vpop.f32.mrf.mxu0
    %v478 = vadd.f32 0.0, %v477
    %v479 = vpop.f32.mrf.mxu0
    %v480 = vadd.f32 0.0, %v479
    %481 = vmatmul.bf16.gmra.mxu0 %v277
    %v482 = vpop.f32.mrf.mxu0
    %v483 = vadd.f32 0.0, %v482
    %v484 = vpop.f32.mrf.mxu0
    %v485 = vadd.f32 0.0, %v484
    %486 = vmatmul.bf16.gmra.mxu0 %v278
    %v487 = vpop.f32.mrf.mxu0
    %v488 = vadd.f32 0.0, %v487
    %v489 = vpop.f32.mrf.mxu0
    %v490 = vadd.f32 0.0, %v489
    %491 = vmatmul.bf16.gmra.mxu0 %v279
    %v492 = vpop.f32.mrf.mxu0
    %v493 = vadd.f32 0.0, %v492
    %v494 = vpop.f32.mrf.mxu0
    %v495 = vadd.f32 0.0, %v494
    %496 = vdwg.mxu0
    %497 = vmatpush.bf16.msra.mxu0 %v413
    %498 = vmatpush.bf16.msra.mxu0 %v409
    %499 = vmatpush.bf16.msra.mxu0 %v405
    %500 = vmatpush.bf16.msra.mxu0 %v401
    %501 = vmatpush.bf16.msra.mxu0 %v397
    %502 = vmatpush.bf16.msra.mxu0 %v393
    %503 = vmatpush.bf16.msra.mxu0 %v389
    %504 = vmatpush.bf16.msra.mxu0 %v385
    %505 = vmatmul.bf16.gmra.mxu0 %v272
    %v506 = vpop.f32.mrf.mxu0
    %v507 = vadd.f32 0.0, %v506
    %v508 = vpop.f32.mrf.mxu0
    %v509 = vadd.f32 0.0, %v508
    %510 = vmatmul.bf16.gmra.mxu0 %v273
    %v511 = vpop.f32.mrf.mxu0
    %v512 = vadd.f32 0.0, %v511
    %v513 = vpop.f32.mrf.mxu0
    %v514 = vadd.f32 0.0, %v513
    %515 = vmatmul.bf16.gmra.mxu0 %v274
    %v516 = vpop.f32.mrf.mxu0
    %v517 = vadd.f32 0.0, %v516
    %v518 = vpop.f32.mrf.mxu0
    %v519 = vadd.f32 0.0, %v518
    %520 = vmatmul.bf16.gmra.mxu0 %v275
    %v521 = vpop.f32.mrf.mxu0
    %v522 = vadd.f32 0.0, %v521
    %v523 = vpop.f32.mrf.mxu0
    %v524 = vadd.f32 0.0, %v523
    %525 = vmatmul.bf16.gmra.mxu0 %v276
    %v526 = vpop.f32.mrf.mxu0
    %v527 = vadd.f32 0.0, %v526
    %v528 = vpop.f32.mrf.mxu0
    %v529 = vadd.f32 0.0, %v528
    %530 = vmatmul.bf16.gmra.mxu0 %v277
    %v531 = vpop.f32.mrf.mxu0
    %v532 = vadd.f32 0.0, %v531
    %v533 = vpop.f32.mrf.mxu0
    %v534 = vadd.f32 0.0, %v533
    %535 = vmatmul.bf16.gmra.mxu0 %v278
    %v536 = vpop.f32.mrf.mxu0
    %v537 = vadd.f32 0.0, %v536
    %v538 = vpop.f32.mrf.mxu0
    %v539 = vadd.f32 0.0, %v538
    %540 = vmatmul.bf16.gmra.mxu0 %v279
    %v541 = vpop.f32.mrf.mxu0
    %v542 = vadd.f32 0.0, %v541
    %v543 = vpop.f32.mrf.mxu0
    %v544 = vadd.f32 0.0, %v543
    %545 = vdwg.mxu0
    %546 = vmatpush.bf16.msra.mxu0 %v414
    %547 = vmatpush.bf16.msra.mxu0 %v410
    %548 = vmatpush.bf16.msra.mxu0 %v406
    %549 = vmatpush.bf16.msra.mxu0 %v402
    %550 = vmatpush.bf16.msra.mxu0 %v398
    %551 = vmatpush.bf16.msra.mxu0 %v394
    %552 = vmatpush.bf16.msra.mxu0 %v390
    %553 = vmatpush.bf16.msra.mxu0 %v386
    %554 = vmatmul.bf16.gmra.mxu0 %v272
    %v555 = vpop.f32.mrf.mxu0
    %v556 = vadd.f32 0.0, %v555
    %v557 = vpop.f32.mrf.mxu0
    %v558 = vadd.f32 0.0, %v557
    %559 = vmatmul.bf16.gmra.mxu0 %v273
    %v560 = vpop.f32.mrf.mxu0
    %v561 = vadd.f32 0.0, %v560
    %v562 = vpop.f32.mrf.mxu0
    %v563 = vadd.f32 0.0, %v562
    %564 = vmatmul.bf16.gmra.mxu0 %v274
    %v565 = vpop.f32.mrf.mxu0
    %v566 = vadd.f32 0.0, %v565
    %v567 = vpop.f32.mrf.mxu0
    %v568 = vadd.f32 0.0, %v567
    %569 = vmatmul.bf16.gmra.mxu0 %v275
    %v570 = vpop.f32.mrf.mxu0
    %v571 = vadd.f32 0.0, %v570
    %v572 = vpop.f32.mrf.mxu0
    %v573 = vadd.f32 0.0, %v572
    %574 = vmatmul.bf16.gmra.mxu0 %v276
    %v575 = vpop.f32.mrf.mxu0
    %v576 = vadd.f32 0.0, %v575
    %v577 = vpop.f32.mrf.mxu0
    %v578 = vadd.f32 0.0, %v577
    %579 = vmatmul.bf16.gmra.mxu0 %v277
    %v580 = vpop.f32.mrf.mxu0
    %v581 = vadd.f32 0.0, %v580
    %v582 = vpop.f32.mrf.mxu0
    %v583 = vadd.f32 0.0, %v582
    %584 = vmatmul.bf16.gmra.mxu0 %v278
    %v585 = vpop.f32.mrf.mxu0
    %v586 = vadd.f32 0.0, %v585
    %v587 = vpop.f32.mrf.mxu0
    %v588 = vadd.f32 0.0, %v587
    %589 = vmatmul.bf16.gmra.mxu0 %v279
    %v590 = vpop.f32.mrf.mxu0
    %v591 = vadd.f32 0.0, %v590
    %v592 = vpop.f32.mrf.mxu0
    %v593 = vadd.f32 0.0, %v592
    %594 = vdwg.mxu0
    %595 = vmatpush.bf16.msra.mxu0 %v415
    %596 = vmatpush.bf16.msra.mxu0 %v411
    %597 = vmatpush.bf16.msra.mxu0 %v407
    %598 = vmatpush.bf16.msra.mxu0 %v403
    %599 = vmatpush.bf16.msra.mxu0 %v399
    %600 = vmatpush.bf16.msra.mxu0 %v395
    %601 = vmatpush.bf16.msra.mxu0 %v391
    %602 = vmatpush.bf16.msra.mxu0 %v387
    %603 = vmatmul.bf16.gmra.mxu0 %v272
    %v604 = vpop.f32.mrf.mxu0
    %v605 = vadd.f32 0.0, %v604
    %v606 = vpop.f32.mrf.mxu0
    %v607 = vadd.f32 0.0, %v606
    %608 = vmatmul.bf16.gmra.mxu0 %v273
    %v609 = vpop.f32.mrf.mxu0
    %v610 = vadd.f32 0.0, %v609
    %v611 = vpop.f32.mrf.mxu0
    %v612 = vadd.f32 0.0, %v611
    %613 = vmatmul.bf16.gmra.mxu0 %v274
    %v614 = vpop.f32.mrf.mxu0
    %v615 = vadd.f32 0.0, %v614
    %v616 = vpop.f32.mrf.mxu0
    %v617 = vadd.f32 0.0, %v616
    %618 = vmatmul.bf16.gmra.mxu0 %v275
    %v619 = vpop.f32.mrf.mxu0
    %v620 = vadd.f32 0.0, %v619
    %v621 = vpop.f32.mrf.mxu0
    %v622 = vadd.f32 0.0, %v621
    %623 = vmatmul.bf16.gmra.mxu0 %v276
    %v624 = vpop.f32.mrf.mxu0
    %v625 = vadd.f32 0.0, %v624
    %v626 = vpop.f32.mrf.mxu0
    %v627 = vadd.f32 0.0, %v626
    %628 = vmatmul.bf16.gmra.mxu0 %v277
    %v629 = vpop.f32.mrf.mxu0
    %v630 = vadd.f32 0.0, %v629
    %v631 = vpop.f32.mrf.mxu0
    %v632 = vadd.f32 0.0, %v631
    %633 = vmatmul.bf16.gmra.mxu0 %v278
    %v634 = vpop.f32.mrf.mxu0
    %v635 = vadd.f32 0.0, %v634
    %v636 = vpop.f32.mrf.mxu0
    %v637 = vadd.f32 0.0, %v636
    %638 = vmatmul.bf16.gmra.mxu0 %v279
    %v639 = vpop.f32.mrf.mxu0
    %v640 = vadd.f32 0.0, %v639
    %v641 = vpop.f32.mrf.mxu0
    %v642 = vadd.f32 0.0, %v641
    %643 = vdwg.mxu0
    %v644 = vadd.f32 %v128, %v458
    %v645 = vadd.f32 %v129, %v507
    %v646 = vadd.f32 %v130, %v556
    %v647 = vadd.f32 %v131, %v605
    %v648 = vadd.f32 %v132, %v460
    %v649 = vadd.f32 %v133, %v509
    %v650 = vadd.f32 %v134, %v558
    %v651 = vadd.f32 %v135, %v607
    %v652 = vadd.f32 %v136, %v463
    %v653 = vadd.f32 %v137, %v512
    %v654 = vadd.f32 %v138, %v561
    %v655 = vadd.f32 %v139, %v610
    %v656 = vadd.f32 %v140, %v465
    %v657 = vadd.f32 %v141, %v514
    %v658 = vadd.f32 %v142, %v563
    %v659 = vadd.f32 %v143, %v612
    %v660 = vadd.f32 %v144, %v468
    %v661 = vadd.f32 %v145, %v517
    %v662 = vadd.f32 %v146, %v566
    %v663 = vadd.f32 %v147, %v615
    %v664 = vadd.f32 %v148, %v470
    %v665 = vadd.f32 %v149, %v519
    %v666 = vadd.f32 %v150, %v568
    %v667 = vadd.f32 %v151, %v617
    %v668 = vadd.f32 %v152, %v473
    %v669 = vadd.f32 %v153, %v522
    %v670 = vadd.f32 %v154, %v571
    %v671 = vadd.f32 %v155, %v620
    %v672 = vadd.f32 %v156, %v475
    %v673 = vadd.f32 %v157, %v524
    %v674 = vadd.f32 %v158, %v573
    %v675 = vadd.f32 %v159, %v622
    %v676 = vadd.f32 %v160, %v478
    %v677 = vadd.f32 %v161, %v527
    %v678 = vadd.f32 %v162, %v576
    %v679 = vadd.f32 %v163, %v625
    %v680 = vadd.f32 %v164, %v480
    %v681 = vadd.f32 %v165, %v529
    %v682 = vadd.f32 %v166, %v578
    %v683 = vadd.f32 %v167, %v627
    %v684 = vadd.f32 %v168, %v483
    %v685 = vadd.f32 %v169, %v532
    %v686 = vadd.f32 %v170, %v581
    %v687 = vadd.f32 %v171, %v630
    %v688 = vadd.f32 %v172, %v485
    %v689 = vadd.f32 %v173, %v534
    %v690 = vadd.f32 %v174, %v583
    %v691 = vadd.f32 %v175, %v632
    %v692 = vadd.f32 %v176, %v488
    %v693 = vadd.f32 %v177, %v537
    %v694 = vadd.f32 %v178, %v586
    %v695 = vadd.f32 %v179, %v635
    %v696 = vadd.f32 %v180, %v490
    %v697 = vadd.f32 %v181, %v539
    %v698 = vadd.f32 %v182, %v588
    %v699 = vadd.f32 %v183, %v637
    %v700 = vadd.f32 %v184, %v493
    %v701 = vadd.f32 %v185, %v542
    %v702 = vadd.f32 %v186, %v591
    %v703 = vadd.f32 %v187, %v640
    %v704 = vadd.f32 %v188, %v495
    %v705 = vadd.f32 %v189, %v544
    %v706 = vadd.f32 %v190, %v593
    %v707 = vadd.f32 %v191, %v642
    %708 = vst [vmem:[#allocation2] sm:$0xff] %v644
    %709 = vst [vmem:[#allocation2 + $0x8] sm:$0xff] %v645
    %710 = vst [vmem:[#allocation2 + $0x10] sm:$0xff] %v646
    %711 = vst [vmem:[#allocation2 + $0x18] sm:$0xff] %v647
    %712 = vst [vmem:[#allocation2 + $0x20] sm:$0xff] %v648
    %713 = vst [vmem:[#allocation2 + $0x28] sm:$0xff] %v649
    %714 = vst [vmem:[#allocation2 + $0x30] sm:$0xff] %v650
    %715 = vst [vmem:[#allocation2 + $0x38] sm:$0xff] %v651
    %716 = vst [vmem:[#allocation2 + $0x40] sm:$0xff] %v652
    %717 = vst [vmem:[#allocation2 + $0x48] sm:$0xff] %v653
    %718 = vst [vmem:[#allocation2 + $0x50] sm:$0xff] %v654
    %719 = vst [vmem:[#allocation2 + $0x58] sm:$0xff] %v655
    %720 = vst [vmem:[#allocation2 + $0x60] sm:$0xff] %v656
    %721 = vst [vmem:[#allocation2 + $0x68] sm:$0xff] %v657
    %722 = vst [vmem:[#allocation2 + $0x70] sm:$0xff] %v658
    %723 = vst [vmem:[#allocation2 + $0x78] sm:$0xff] %v659
    %724 = vst [vmem:[#allocation2 + $0x80] sm:$0xff] %v660
    %725 = vst [vmem:[#allocation2 + $0x88] sm:$0xff] %v661
    %726 = vst [vmem:[#allocation2 + $0x90] sm:$0xff] %v662
    %727 = vst [vmem:[#allocation2 + $0x98] sm:$0xff] %v663
    %728 = vst [vmem:[#allocation2 + $0xa0] sm:$0xff] %v664
    %729 = vst [vmem:[#allocation2 + $0xa8] sm:$0xff] %v665
    %730 = vst [vmem:[#allocation2 + $0xb0] sm:$0xff] %v666
    %731 = vst [vmem:[#allocation2 + $0xb8] sm:$0xff] %v667
    %732 = vst [vmem:[#allocation2 + $0xc0] sm:$0xff] %v668
    %733 = vst [vmem:[#allocation2 + $0xc8] sm:$0xff] %v669
    %734 = vst [vmem:[#allocation2 + $0xd0] sm:$0xff] %v670
    %735 = vst [vmem:[#allocation2 + $0xd8] sm:$0xff] %v671
    %736 = vst [vmem:[#allocation2 + $0xe0] sm:$0xff] %v672
    %737 = vst [vmem:[#allocation2 + $0xe8] sm:$0xff] %v673
    %738 = vst [vmem:[#allocation2 + $0xf0] sm:$0xff] %v674
    %739 = vst [vmem:[#allocation2 + $0xf8] sm:$0xff] %v675
    %740 = vst [vmem:[#allocation2 + $0x100] sm:$0xff] %v676
    %741 = vst [vmem:[#allocation2 + $0x108] sm:$0xff] %v677
    %742 = vst [vmem:[#allocation2 + $0x110] sm:$0xff] %v678
    %743 = vst [vmem:[#allocation2 + $0x118] sm:$0xff] %v679
    %744 = vst [vmem:[#allocation2 + $0x120] sm:$0xff] %v680
    %745 = vst [vmem:[#allocation2 + $0x128] sm:$0xff] %v681
    %746 = vst [vmem:[#allocation2 + $0x130] sm:$0xff] %v682
    %747 = vst [vmem:[#allocation2 + $0x138] sm:$0xff] %v683
    %748 = vst [vmem:[#allocation2 + $0x140] sm:$0xff] %v684
    %749 = vst [vmem:[#allocation2 + $0x148] sm:$0xff] %v685
    %750 = vst [vmem:[#allocation2 + $0x150] sm:$0xff] %v686
    %751 = vst [vmem:[#allocation2 + $0x158] sm:$0xff] %v687
    %752 = vst [vmem:[#allocation2 + $0x160] sm:$0xff] %v688
    %753 = vst [vmem:[#allocation2 + $0x168] sm:$0xff] %v689
    %754 = vst [vmem:[#allocation2 + $0x170] sm:$0xff] %v690
    %755 = vst [vmem:[#allocation2 + $0x178] sm:$0xff] %v691
    %756 = vst [vmem:[#allocation2 + $0x180] sm:$0xff] %v692
    %757 = vst [vmem:[#allocation2 + $0x188] sm:$0xff] %v693
    %758 = vst [vmem:[#allocation2 + $0x190] sm:$0xff] %v694
    %759 = vst [vmem:[#allocation2 + $0x198] sm:$0xff] %v695
    %760 = vst [vmem:[#allocation2 + $0x1a0] sm:$0xff] %v696
    %761 = vst [vmem:[#allocation2 + $0x1a8] sm:$0xff] %v697
    %762 = vst [vmem:[#allocation2 + $0x1b0] sm:$0xff] %v698
    %763 = vst [vmem:[#allocation2 + $0x1b8] sm:$0xff] %v699
    %764 = vst [vmem:[#allocation2 + $0x1c0] sm:$0xff] %v700
    %765 = vst [vmem:[#allocation2 + $0x1c8] sm:$0xff] %v701
    %766 = vst [vmem:[#allocation2 + $0x1d0] sm:$0xff] %v702
    %767 = vst [vmem:[#allocation2 + $0x1d8] sm:$0xff] %v703
    %768 = vst [vmem:[#allocation2 + $0x1e0] sm:$0xff] %v704
    %769 = vst [vmem:[#allocation2 + $0x1e8] sm:$0xff] %v705
    %770 = vst [vmem:[#allocation2 + $0x1f0] sm:$0xff] %v706
    %771 = vst [vmem:[#allocation2 + $0x1f8] sm:$0xff] %v707
    // Predicated region
    $region30: #{tpu_custom_call.1} parent=1 // pred_check
      %p772 = pneg %p60
    $region31: #{tpu_custom_call.1} parent=1 // pred_check_branch
      %774 = sbr.rel (%p772) target = $region33
    $region32: #{tpu_custom_call.1} parent=1 // pred_region
      %v775 = vld [vmem:[#allocation2] sm:$0xff]
      %v776 = vld [vmem:[#allocation2 + $0x8] sm:$0xff]
      %v777 = vld [vmem:[#allocation2 + $0x10] sm:$0xff]
      %v778 = vld [vmem:[#allocation2 + $0x18] sm:$0xff]
      %v779 = vld [vmem:[#allocation2 + $0x20] sm:$0xff]
      %v780 = vld [vmem:[#allocation2 + $0x28] sm:$0xff]
      %v781 = vld [vmem:[#allocation2 + $0x30] sm:$0xff]
      %v782 = vld [vmem:[#allocation2 + $0x38] sm:$0xff]
      %v783 = vld [vmem:[#allocation2 + $0x40] sm:$0xff]
      %v784 = vld [vmem:[#allocation2 + $0x48] sm:$0xff]
      %v785 = vld [vmem:[#allocation2 + $0x50] sm:$0xff]
      %v786 = vld [vmem:[#allocation2 + $0x58] sm:$0xff]
      %v787 = vld [vmem:[#allocation2 + $0x60] sm:$0xff]
      %v788 = vld [vmem:[#allocation2 + $0x68] sm:$0xff]
      %v789 = vld [vmem:[#allocation2 + $0x70] sm:$0xff]
      %v790 = vld [vmem:[#allocation2 + $0x78] sm:$0xff]
      %v791 = vld [vmem:[#allocation2 + $0x80] sm:$0xff]
      %v792 = vld [vmem:[#allocation2 + $0x88] sm:$0xff]
      %v793 = vld [vmem:[#allocation2 + $0x90] sm:$0xff]
      %v794 = vld [vmem:[#allocation2 + $0x98] sm:$0xff]
      %v795 = vld [vmem:[#allocation2 + $0xa0] sm:$0xff]
      %v796 = vld [vmem:[#allocation2 + $0xa8] sm:$0xff]
      %v797 = vld [vmem:[#allocation2 + $0xb0] sm:$0xff]
      %v798 = vld [vmem:[#allocation2 + $0xb8] sm:$0xff]
      %v799 = vld [vmem:[#allocation2 + $0xc0] sm:$0xff]
      %v800 = vld [vmem:[#allocation2 + $0xc8] sm:$0xff]
      %v801 = vld [vmem:[#allocation2 + $0xd0] sm:$0xff]
      %v802 = vld [vmem:[#allocation2 + $0xd8] sm:$0xff]
      %v803 = vld [vmem:[#allocation2 + $0xe0] sm:$0xff]
      %v804 = vld [vmem:[#allocation2 + $0xe8] sm:$0xff]
      %v805 = vld [vmem:[#allocation2 + $0xf0] sm:$0xff]
      %v806 = vld [vmem:[#allocation2 + $0xf8] sm:$0xff]
      %v807 = vld [vmem:[#allocation2 + $0x100] sm:$0xff]
      %v808 = vld [vmem:[#allocation2 + $0x108] sm:$0xff]
      %v809 = vld [vmem:[#allocation2 + $0x110] sm:$0xff]
      %v810 = vld [vmem:[#allocation2 + $0x118] sm:$0xff]
      %v811 = vld [vmem:[#allocation2 + $0x120] sm:$0xff]
      %v812 = vld [vmem:[#allocation2 + $0x128] sm:$0xff]
      %v813 = vld [vmem:[#allocation2 + $0x130] sm:$0xff]
      %v814 = vld [vmem:[#allocation2 + $0x138] sm:$0xff]
      %v815 = vld [vmem:[#allocation2 + $0x140] sm:$0xff]
      %v816 = vld [vmem:[#allocation2 + $0x148] sm:$0xff]
      %v817 = vld [vmem:[#allocation2 + $0x150] sm:$0xff]
      %v818 = vld [vmem:[#allocation2 + $0x158] sm:$0xff]
      %v819 = vld [vmem:[#allocation2 + $0x160] sm:$0xff]
      %v820 = vld [vmem:[#allocation2 + $0x168] sm:$0xff]
      %v821 = vld [vmem:[#allocation2 + $0x170] sm:$0xff]
      %v822 = vld [vmem:[#allocation2 + $0x178] sm:$0xff]
      %v823 = vld [vmem:[#allocation2 + $0x180] sm:$0xff]
      %v824 = vld [vmem:[#allocation2 + $0x188] sm:$0xff]
      %v825 = vld [vmem:[#allocation2 + $0x190] sm:$0xff]
      %v826 = vld [vmem:[#allocation2 + $0x198] sm:$0xff]
      %v827 = vld [vmem:[#allocation2 + $0x1a0] sm:$0xff]
      %v828 = vld [vmem:[#allocation2 + $0x1a8] sm:$0xff]
      %v829 = vld [vmem:[#allocation2 + $0x1b0] sm:$0xff]
      %v830 = vld [vmem:[#allocation2 + $0x1b8] sm:$0xff]
      %v831 = vld [vmem:[#allocation2 + $0x1c0] sm:$0xff]
      %v832 = vld [vmem:[#allocation2 + $0x1c8] sm:$0xff]
      %v833 = vld [vmem:[#allocation2 + $0x1d0] sm:$0xff]
      %v834 = vld [vmem:[#allocation2 + $0x1d8] sm:$0xff]
      %v835 = vld [vmem:[#allocation2 + $0x1e0] sm:$0xff]
      %v836 = vld [vmem:[#allocation2 + $0x1e8] sm:$0xff]
      %v837 = vld [vmem:[#allocation2 + $0x1f0] sm:$0xff]
      %v838 = vld [vmem:[#allocation2 + $0x1f8] sm:$0xff]
      %v839 = vld [vmem:[#allocation8] sm:$0xf]
      %v841 = vperm.slane %v839, 0
      %v842 = vperm.slane %v839, 1
      %v843 = vperm.slane %v839, 2
      %v844 = vperm.slane %v839, 3
      %v849 = vadd.f32 %v775, %v841
      %v850 = vadd.f32 %v776, %v842
      %v851 = vadd.f32 %v777, %v843
      %v852 = vadd.f32 %v778, %v844
      %v853 = vadd.f32 %v779, %v841
      %v854 = vadd.f32 %v780, %v842
      %v855 = vadd.f32 %v781, %v843
      %v856 = vadd.f32 %v782, %v844
      %v857 = vadd.f32 %v783, %v841
      %v858 = vadd.f32 %v784, %v842
      %v859 = vadd.f32 %v785, %v843
      %v860 = vadd.f32 %v786, %v844
      %v861 = vadd.f32 %v787, %v841
      %v862 = vadd.f32 %v788, %v842
      %v863 = vadd.f32 %v789, %v843
      %v864 = vadd.f32 %v790, %v844
      %v865 = vadd.f32 %v791, %v841
      %v866 = vadd.f32 %v792, %v842
      %v867 = vadd.f32 %v793, %v843
      %v868 = vadd.f32 %v794, %v844
      %v869 = vadd.f32 %v795, %v841
      %v870 = vadd.f32 %v796, %v842
      %v871 = vadd.f32 %v797, %v843
      %v872 = vadd.f32 %v798, %v844
      %v873 = vadd.f32 %v799, %v841
      %v874 = vadd.f32 %v800, %v842
      %v875 = vadd.f32 %v801, %v843
      %v876 = vadd.f32 %v802, %v844
      %v877 = vadd.f32 %v803, %v841
      %v878 = vadd.f32 %v804, %v842
      %v879 = vadd.f32 %v805, %v843
      %v880 = vadd.f32 %v806, %v844
      %v881 = vadd.f32 %v807, %v841
      %v882 = vadd.f32 %v808, %v842
      %v883 = vadd.f32 %v809, %v843
      %v884 = vadd.f32 %v810, %v844
      %v885 = vadd.f32 %v811, %v841
      %v886 = vadd.f32 %v812, %v842
      %v887 = vadd.f32 %v813, %v843
      %v888 = vadd.f32 %v814, %v844
      %v889 = vadd.f32 %v815, %v841
      %v890 = vadd.f32 %v816, %v842
      %v891 = vadd.f32 %v817, %v843
      %v892 = vadd.f32 %v818, %v844
      %v893 = vadd.f32 %v819, %v841
      %v894 = vadd.f32 %v820, %v842
      %v895 = vadd.f32 %v821, %v843
      %v896 = vadd.f32 %v822, %v844
      %v897 = vadd.f32 %v823, %v841
      %v898 = vadd.f32 %v824, %v842
      %v899 = vadd.f32 %v825, %v843
      %v900 = vadd.f32 %v826, %v844
      %v901 = vadd.f32 %v827, %v841
      %v902 = vadd.f32 %v828, %v842
      %v903 = vadd.f32 %v829, %v843
      %v904 = vadd.f32 %v830, %v844
      %v905 = vadd.f32 %v831, %v841
      %v906 = vadd.f32 %v832, %v842
      %v907 = vadd.f32 %v833, %v843
      %v908 = vadd.f32 %v834, %v844
      %v909 = vadd.f32 %v835, %v841
      %v910 = vadd.f32 %v836, %v842
      %v911 = vadd.f32 %v837, %v843
      %v912 = vadd.f32 %v838, %v844
      %v913 = vpack.c.bf16 %v850, %v849
      %v914 = vpack.c.bf16 %v852, %v851
      %v915 = vpack.c.bf16 %v854, %v853
      %v916 = vpack.c.bf16 %v856, %v855
      %v917 = vpack.c.bf16 %v858, %v857
      %v918 = vpack.c.bf16 %v860, %v859
      %v919 = vpack.c.bf16 %v862, %v861
      %v920 = vpack.c.bf16 %v864, %v863
      %v921 = vpack.c.bf16 %v866, %v865
      %v922 = vpack.c.bf16 %v868, %v867
      %v923 = vpack.c.bf16 %v870, %v869
      %v924 = vpack.c.bf16 %v872, %v871
      %v925 = vpack.c.bf16 %v874, %v873
      %v926 = vpack.c.bf16 %v876, %v875
      %v927 = vpack.c.bf16 %v878, %v877
      %v928 = vpack.c.bf16 %v880, %v879
      %v929 = vpack.c.bf16 %v882, %v881
      %v930 = vpack.c.bf16 %v884, %v883
      %v931 = vpack.c.bf16 %v886, %v885
      %v932 = vpack.c.bf16 %v888, %v887
      %v933 = vpack.c.bf16 %v890, %v889
      %v934 = vpack.c.bf16 %v892, %v891
      %v935 = vpack.c.bf16 %v894, %v893
      %v936 = vpack.c.bf16 %v896, %v895
      %v937 = vpack.c.bf16 %v898, %v897
      %v938 = vpack.c.bf16 %v900, %v899
      %v939 = vpack.c.bf16 %v902, %v901
      %v940 = vpack.c.bf16 %v904, %v903
      %v941 = vpack.c.bf16 %v906, %v905
      %v942 = vpack.c.bf16 %v908, %v907
      %v943 = vpack.c.bf16 %v910, %v909
      %v944 = vpack.c.bf16 %v912, %v911
      %945 = vst [vmem:[#allocation9] sm:$0xff] %v913
      %946 = vst [vmem:[#allocation9 + $0x8] sm:$0xff] %v914
      %947 = vst [vmem:[#allocation9 + $0x10] sm:$0xff] %v915
      %948 = vst [vmem:[#allocation9 + $0x18] sm:$0xff] %v916
      %949 = vst [vmem:[#allocation9 + $0x20] sm:$0xff] %v917
      %950 = vst [vmem:[#allocation9 + $0x28] sm:$0xff] %v918
      %951 = vst [vmem:[#allocation9 + $0x30] sm:$0xff] %v919
      %952 = vst [vmem:[#allocation9 + $0x38] sm:$0xff] %v920
      %953 = vst [vmem:[#allocation9 + $0x40] sm:$0xff] %v921
      %954 = vst [vmem:[#allocation9 + $0x48] sm:$0xff] %v922
      %955 = vst [vmem:[#allocation9 + $0x50] sm:$0xff] %v923
      %956 = vst [vmem:[#allocation9 + $0x58] sm:$0xff] %v924
      %957 = vst [vmem:[#allocation9 + $0x60] sm:$0xff] %v925
      %958 = vst [vmem:[#allocation9 + $0x68] sm:$0xff] %v926
      %959 = vst [vmem:[#allocation9 + $0x70] sm:$0xff] %v927
      %960 = vst [vmem:[#allocation9 + $0x78] sm:$0xff] %v928
      %961 = vst [vmem:[#allocation9 + $0x80] sm:$0xff] %v929
      %962 = vst [vmem:[#allocation9 + $0x88] sm:$0xff] %v930
      %963 = vst [vmem:[#allocation9 + $0x90] sm:$0xff] %v931
      %964 = vst [vmem:[#allocation9 + $0x98] sm:$0xff] %v932
      %965 = vst [vmem:[#allocation9 + $0xa0] sm:$0xff] %v933
      %966 = vst [vmem:[#allocation9 + $0xa8] sm:$0xff] %v934
      %967 = vst [vmem:[#allocation9 + $0xb0] sm:$0xff] %v935
      %968 = vst [vmem:[#allocation9 + $0xb8] sm:$0xff] %v936
      %969 = vst [vmem:[#allocation9 + $0xc0] sm:$0xff] %v937
      %970 = vst [vmem:[#allocation9 + $0xc8] sm:$0xff] %v938
      %971 = vst [vmem:[#allocation9 + $0xd0] sm:$0xff] %v939
      %972 = vst [vmem:[#allocation9 + $0xd8] sm:$0xff] %v940
      %973 = vst [vmem:[#allocation9 + $0xe0] sm:$0xff] %v941
      %974 = vst [vmem:[#allocation9 + $0xe8] sm:$0xff] %v942
      %975 = vst [vmem:[#allocation9 + $0xf0] sm:$0xff] %v943
      %976 = vst [vmem:[#allocation9 + $0xf8] sm:$0xff] %v944
    $region33: #{tpu_custom_call.1} parent=1 // pred_fallthru
      _
    // Predicated region
    $region34: #{tpu_custom_call.1} parent=1 // pred_check
      _
    $region35: #{tpu_custom_call.1} parent=1 // pred_check_branch
      %978 = sbr.rel (0) target = $region37
    $region36: #{tpu_custom_call.1} parent=1 // pred_region
      %980 = vsyncadd [#allocation5], 0
      %s981 = sshll.u32 [#allocation9], 4
      %s982 = int_to_ptr.vmem [resolvable:$true] %s981
      %s983 = sshll.u32 %s3, 4
      %s984 = int_to_ptr.hbm [resolvable:$true] %s983
      %989 = dma.vmem_to_hbm [thread:$0]  %s982, 4096, %s984, [#allocation5], 256, 256, 16
    $region37: #{tpu_custom_call.1} parent=1 // pred_fallthru
      _
    // Predicated region
    $region38: #{tpu_custom_call.1} parent=1 // pred_check
      _
    $region39: #{tpu_custom_call.1} parent=1 // pred_check_branch
      %991 = sbr.rel (0) target = $region41
    $region40: #{tpu_custom_call.1} parent=1 // pred_region
      %993 = dma.done [#allocation5], 4096
    $region41: #{tpu_custom_call.1} parent=1 // pred_fallthru
      _
    %994 = vsyncpa [#allocation4], 1
    %995 = vsyncpa [#allocation7], 1
    %996 = vsyncpa [#allocation5], 1

</llo_original>
